<compile_context>
chip_gen: v6e
topology: v6e:2x2x1
jax: 0.10.0
libtpu: 0.0.40
codegen_flags: <defaults>
</compile_context>

<pallas_src>
import jax
import jax.numpy as jnp
from jax import lax
from jax.experimental import pallas as pl
from jax.experimental.pallas import tpu as pltpu


def _interp_matrix(in_size: int, out_size: int) -> jnp.ndarray:
    """[out_size, in_size] bilinear interpolation matrix, align_corners=True."""
    if out_size == 1:
        return jnp.zeros((1, in_size), jnp.float32).at[0, 0].set(1.0)
    scale = (in_size - 1) / (out_size - 1)
    src = jnp.arange(out_size, dtype=jnp.float32) * scale
    i0 = jnp.clip(jnp.floor(src).astype(jnp.int32), 0, in_size - 1)
    i1 = jnp.clip(i0 + 1, 0, in_size - 1)
    w1 = src - i0.astype(jnp.float32)
    w0 = 1.0 - w1
    rows = jnp.arange(out_size)
    m = jnp.zeros((out_size, in_size), jnp.float32)
    m = m.at[rows, i0].add(w0)
    m = m.at[rows, i1].add(w1)
    return m


def _pick_tile(full: int, max_tile: int, multiple: int):
    """Choose a tile size and padded extent so padded % tile == 0.

    If the dimension fits in one tile, use it whole (full-dim blocks are always
    legal). Otherwise split into roughly even tiles rounded up to the hardware
    multiple (sublane/lane granularity), zero-padding the remainder.
    """
    if full <= max_tile:
        return full, full
    n = -(-full // max_tile)                  # number of tiles
    tile = -(-full // n)                      # roughly even split
    tile = -(-tile // multiple) * multiple    # round up to hw multiple
    return tile, tile * n


def _make_kernel(C: int, H: int, unroll: bool):
    def kernel(x_ref, awt_ref, ah_ref, mask_ref, out_ref, t_ref):
        # x_ref:   [C*H, W]    all channel heatmaps for one batch element
        # awt_ref: [W, tRW]    col-interpolation tile (transposed)
        # ah_ref:  [tRH, H]    row-interpolation tile
        # mask_ref:[tRH, tRW]  uint8 mask (nonzero == keep)
        # out_ref: [tRH, tRW]  int32 colored mask tile
        # t_ref:   [C*H, tRW]  f32 VMEM scratch (W-contracted heatmaps)

        # The W-contraction depends only on (batch, column tile). The row-tile
        # axis is the innermost grid axis, so compute it once per column tile
        # and reuse it for every row tile (scratch persists across grid steps).
        @pl.when(pl.program_id(2) == 0)
        def _():
            t_ref[...] = jnp.dot(x_ref[...], awt_ref[...],
                                 preferred_element_type=jnp.float32)

        ah = ah_ref[...]  # (tRH, H)

        def channel_logits(off):
            return jnp.dot(ah, t_ref[pl.ds(off, H), :],
                           preferred_element_type=jnp.float32)

        # Running argmax over channels on the logits directly (sigmoid is
        # monotonic -> argmax-preserving). Strict '>' keeps the FIRST maximal
        # channel on ties, matching torch.argmax.
        best_val = channel_logits(0)
        best_idx = jnp.zeros(best_val.shape, jnp.int32)

        def body(c, carry):
            bv, bi = carry
            off = pl.multiple_of(c * H, H)
            cur = channel_logits(off)
            take = cur > bv
            bv = jnp.where(take, cur, bv)
            bi = jnp.where(take, c, bi)   # scalar index; no full-tile constant
            return bv, bi

        best_val, best_idx = lax.fori_loop(1, C, body, (best_val, best_idx),
                                           unroll=unroll)

        keep = mask_ref[...] != 0
        out_ref[...] = jnp.where(keep, best_idx, 0)

    return kernel


def colored_mask(part_heatmaps_nhwc, mask_for_colored, strides: int):
    """part_heatmaps_nhwc: [N, H, W, C] float; mask_for_colored: [N, 1, rH, rW]."""
    x = jnp.transpose(part_heatmaps_nhwc, (0, 3, 1, 2)).astype(jnp.float32)  # NCHW
    N, C, H, W = x.shape
    rH, rW = strides * H, strides * W
    # Both torch branches (size= vs scale_factor=) give identical results for
    # integer strides with align_corners=True, so a single path is used.

    # Spatial tiling (sublane multiple 32 covers f32 AND the uint8 mask tiling;
    # lane multiple 128 keeps output tiles lane-dense).
    tRH, rH_pad = _pick_tile(rH, 256, 32)
    tRW, rW_pad = _pick_tile(rW, 512, 128)

    ah = _interp_matrix(H, rH)            # [rH, H]
    awt = _interp_matrix(W, rW).T         # [W, rW]
    if rH_pad != rH:
        ah = jnp.pad(ah, ((0, rH_pad - rH), (0, 0)))
    if rW_pad != rW:
        awt = jnp.pad(awt, ((0, 0), (0, rW_pad - rW)))

    # Mask as uint8: same spatial size as the output, so this cuts the largest
    # input's HBM traffic by 4x vs f32.
    mask_u8 = (mask_for_colored.reshape(N, rH, rW) != 0).astype(jnp.uint8)
    if rH_pad != rH or rW_pad != rW:
        mask_u8 = jnp.pad(mask_u8, ((0, 0), (0, rH_pad - rH), (0, rW_pad - rW)))

    # Flatten channels into the row dim so the W-contraction is one big matmul.
    x_flat = x.reshape(N, C * H, W)

    # Row-tile axis innermost so the W-contracted scratch is reused across it.
    grid = (N, rW_pad // tRW, rH_pad // tRH)
    kernel = _make_kernel(C, H, unroll=(C <= 8))

    out = pl.pallas_call(
        kernel,
        out_shape=jax.ShapeDtypeStruct((N, rH_pad, rW_pad), jnp.int32),
        grid=grid,
        in_specs=[
            pl.BlockSpec((None, C * H, W), lambda n, j, i: (n, 0, 0)),
            pl.BlockSpec((W, tRW), lambda n, j, i: (0, j)),
            pl.BlockSpec((tRH, H), lambda n, j, i: (i, 0)),
            pl.BlockSpec((None, tRH, tRW), lambda n, j, i: (n, i, j)),
        ],
        out_specs=pl.BlockSpec((None, tRH, tRW), lambda n, j, i: (n, i, j)),
        scratch_shapes=[pltpu.VMEM((C * H, tRW), jnp.float32)],
        compiler_params=pltpu.CompilerParams(
            dimension_semantics=("parallel", "parallel", "arbitrary"),
            vmem_limit_bytes=32 * 1024 * 1024,  # safe on v5e/v6e/v7x with these tiles
        ),
    )(x_flat, awt, ah, mask_u8)

    if rH_pad != rH or rW_pad != rW:
        out = out[:, :rH, :rW]
    # keepdim=True on the channel argmax -> [N, 1, rH, rW]
    return out.reshape(N, 1, rH, rW)


def _reference(part_heatmaps_nhwc, mask_for_colored, strides: int):
    """Pure-JAX reference: sigmoid -> argmax (matches the torch module)."""
    x = jnp.transpose(part_heatmaps_nhwc, (0, 3, 1, 2))
    N, C, H, W = x.shape
    rH, rW = strides * H, strides * W
    ah = _interp_matrix(H, rH)            # [rH, H]
    aw = _interp_matrix(W, rW)            # [rW, W]
    # Contract W first, then H (same order as the kernel).
    tmp = jnp.einsum('nchw,rw->nchr', x, aw)
    resized = jnp.einsum('sh,nchr->ncsr', ah, tmp)
    sig = jax.nn.sigmoid(resized)
    am = jnp.argmax(sig, axis=1, keepdims=True).astype(jnp.int32)
    keep = mask_for_colored.reshape(N, 1, rH, rW) != 0
    return jnp.where(keep, am, jnp.zeros_like(am))


if __name__ == "__main__":
    key = jax.random.PRNGKey(0)
    k1, k2 = jax.random.split(key)
    N, H, W, C = 2, 16, 16, 4
    strides = 2
    rH, rW = strides * H, strides * W

    part_heatmaps = jax.random.normal(k1, (N, H, W, C), dtype=jnp.float32)
    mask = (jax.random.normal(k2, (N, 1, rH, rW)) > 0.0).astype(jnp.float32)

    out = colored_mask(part_heatmaps, mask, strides)
    out = jax.block_until_ready(out)

    ref = _reference(part_heatmaps, mask, strides)
    assert out.shape == (N, 1, rH, rW)
    assert out.dtype == jnp.int32
    assert bool(jnp.all(out == ref)), "Pallas output mismatch vs reference"

    print("KERNEL_OK")
</pallas_src>

<mosaic_0001>
module attributes {stable_mosaic.version = 11 : i64} {
  func.func @kernel(%arg0: i32, %arg1: i32, %arg2: i32, %arg3: memref<1x64x16xf32, #tpu.memory_space<vmem>>, %arg4: memref<16x32xf32, #tpu.memory_space<vmem>>, %arg5: memref<32x16xf32, #tpu.memory_space<vmem>>, %arg6: memref<1x32x32xi8, #tpu.memory_space<vmem>>, %arg7: memref<1x32x32xi32, #tpu.memory_space<vmem>>, %arg8: memref<64x32xf32, #tpu.memory_space<vmem>>) attributes {dimension_semantics = [#tpu.dimension_semantics<parallel>, #tpu.dimension_semantics<parallel>, #tpu.dimension_semantics<arbitrary>], iteration_bounds = array<i64: 2, 1, 1>, scalar_prefetch = 0 : i64, scratch_operands = 1 : i64, tpu.core_type = #tpu.core_type<tc>, window_params = [{transform_indices = @transform_0, window_bounds = array<i64: 1, 64, 16>}, {transform_indices = @transform_1, window_bounds = array<i64: 16, 32>}, {transform_indices = @transform_2, window_bounds = array<i64: 32, 16>}, {transform_indices = @transform_3, window_bounds = array<i64: 1, 32, 32>}, {transform_indices = @transform_4, window_bounds = array<i64: 1, 32, 32>}]} {
    %c0_i32 = arith.constant 0 : i32
    %0 = arith.cmpi eq, %arg2, %c0_i32 : i32
    %1 = arith.extui %0 : i1 to i32
    %c0_i32_0 = arith.constant 0 : i32
    %2 = arith.cmpi ne, %1, %c0_i32_0 : i32
    scf.if %2 {
      %c0_21 = arith.constant 0 : index
      %c0_22 = arith.constant 0 : index
      %c0_23 = arith.constant 0 : index
      %43 = vector.load %arg3[%c0_21, %c0_22, %c0_23] : memref<1x64x16xf32, #tpu.memory_space<vmem>>, vector<1x64x16xf32>
      %44 = vector.shape_cast %43 : vector<1x64x16xf32> to vector<64x16xf32>
      %c0_24 = arith.constant 0 : index
      %c0_25 = arith.constant 0 : index
      %45 = vector.load %arg4[%c0_24, %c0_25] : memref<16x32xf32, #tpu.memory_space<vmem>>, vector<16x32xf32>
      %cst_26 = arith.constant dense<0.000000e+00> : vector<64x32xf32>
      %46 = tpu.matmul %44, %45, %cst_26 {dimension_numbers = #tpu.dot_dimension_numbers<[1], [0], [0], [1], [0, 0, 1, 1], [], []>} : vector<64x16xf32>, vector<16x32xf32>, vector<64x32xf32> -> vector<64x32xf32>
      %c0_27 = arith.constant 0 : index
      %c0_28 = arith.constant 0 : index
      %47 = vector.load %arg8[%c0_27, %c0_28] : memref<64x32xf32, #tpu.memory_space<vmem>>, vector<64x32xf32>
      tpu.vector_store %arg8[%c0_27, %c0_28], %46 {strides = array<i32>} : memref<64x32xf32, #tpu.memory_space<vmem>>, vector<64x32xf32>,
    } else {
    }
    %c0 = arith.constant 0 : index
    %c0_1 = arith.constant 0 : index
    %3 = vector.load %arg5[%c0, %c0_1] : memref<32x16xf32, #tpu.memory_space<vmem>>, vector<32x16xf32>
    %c0_2 = arith.constant 0 : index
    %c0_3 = arith.constant 0 : index
    %4 = vector.load %arg8[%c0_2, %c0_3] : memref<64x32xf32, #tpu.memory_space<vmem>>, vector<16x32xf32>
    %cst = arith.constant dense<0.000000e+00> : vector<32x32xf32>
    %5 = tpu.matmul %3, %4, %cst {dimension_numbers = #tpu.dot_dimension_numbers<[1], [0], [0], [1], [0, 0, 1, 1], [], []>} : vector<32x16xf32>, vector<16x32xf32>, vector<32x32xf32> -> vector<32x32xf32>
    %c0_i32_4 = arith.constant 0 : i32
    %6 = vector.broadcast %c0_i32_4 : i32 to vector<32x32xi32>
    %c1_i32 = arith.constant 1 : i32
    %c16_i32 = arith.constant 16 : i32
    %7 = arith.muli %c1_i32, %c16_i32 : i32
    %8 = tpu.assume_multiple %7, 16 : i32
    %9 = arith.index_cast %8 : i32 to index
    %c0_5 = arith.constant 0 : index
    %10 = vector.load %arg8[%9, %c0_5] : memref<64x32xf32, #tpu.memory_space<vmem>>, vector<16x32xf32>
    %cst_6 = arith.constant dense<0.000000e+00> : vector<32x32xf32>
    %11 = tpu.matmul %3, %10, %cst_6 {dimension_numbers = #tpu.dot_dimension_numbers<[1], [0], [0], [1], [0, 0, 1, 1], [], []>} : vector<32x16xf32>, vector<16x32xf32>, vector<32x32xf32> -> vector<32x32xf32>
    %12 = arith.cmpf ogt, %11, %5 : vector<32x32xf32>
    %13 = arith.select %12, %11, %5 : vector<32x32xi1>, vector<32x32xf32>
    %14 = vector.broadcast %c1_i32 : i32 to vector<32x32xi32>
    %15 = arith.select %12, %14, %6 : vector<32x32xi1>, vector<32x32xi32>
    %c2_i32 = arith.constant 2 : i32
    %c16_i32_7 = arith.constant 16 : i32
    %16 = arith.muli %c2_i32, %c16_i32_7 : i32
    %17 = tpu.assume_multiple %16, 16 : i32
    %18 = arith.index_cast %17 : i32 to index
    %c0_8 = arith.constant 0 : index
    %19 = vector.load %arg8[%18, %c0_8] : memref<64x32xf32, #tpu.memory_space<vmem>>, vector<16x32xf32>
    %cst_9 = arith.constant dense<0.000000e+00> : vector<32x32xf32>
    %20 = tpu.matmul %3, %19, %cst_9 {dimension_numbers = #tpu.dot_dimension_numbers<[1], [0], [0], [1], [0, 0, 1, 1], [], []>} : vector<32x16xf32>, vector<16x32xf32>, vector<32x32xf32> -> vector<32x32xf32>
    %21 = arith.cmpf ogt, %20, %13 : vector<32x32xf32>
    %22 = arith.select %21, %20, %13 : vector<32x32xi1>, vector<32x32xf32>
    %23 = vector.broadcast %c2_i32 : i32 to vector<32x32xi32>
    %24 = arith.select %21, %23, %15 : vector<32x32xi1>, vector<32x32xi32>
    %c3_i32 = arith.constant 3 : i32
    %c16_i32_10 = arith.constant 16 : i32
    %25 = arith.muli %c3_i32, %c16_i32_10 : i32
    %26 = tpu.assume_multiple %25, 16 : i32
    %27 = arith.index_cast %26 : i32 to index
    %c0_11 = arith.constant 0 : index
    %28 = vector.load %arg8[%27, %c0_11] : memref<64x32xf32, #tpu.memory_space<vmem>>, vector<16x32xf32>
    %cst_12 = arith.constant dense<0.000000e+00> : vector<32x32xf32>
    %29 = tpu.matmul %3, %28, %cst_12 {dimension_numbers = #tpu.dot_dimension_numbers<[1], [0], [0], [1], [0, 0, 1, 1], [], []>} : vector<32x16xf32>, vector<16x32xf32>, vector<32x32xf32> -> vector<32x32xf32>
    %30 = arith.cmpf ogt, %29, %22 : vector<32x32xf32>
    %31 = arith.select %30, %29, %22 : vector<32x32xi1>, vector<32x32xf32>
    %32 = vector.broadcast %c3_i32 : i32 to vector<32x32xi32>
    %33 = arith.select %30, %32, %24 : vector<32x32xi1>, vector<32x32xi32>
    %c3_i32_13 = arith.constant 3 : i32
    %c0_14 = arith.constant 0 : index
    %c0_15 = arith.constant 0 : index
    %c0_16 = arith.constant 0 : index
    %34 = vector.load %arg6[%c0_14, %c0_15, %c0_16] : memref<1x32x32xi8, #tpu.memory_space<vmem>>, vector<1x32x32xi8>
    %35 = vector.shape_cast %34 : vector<1x32x32xi8> to vector<32x32xi8>
    %c0_i8 = arith.constant 0 : i8
    %36 = vector.broadcast %c0_i8 : i8 to vector<32x32xi8>
    %37 = arith.cmpi ne, %35, %36 : vector<32x32xi8>
    %c0_i32_17 = arith.constant 0 : i32
    %38 = vector.broadcast %c0_i32_17 : i32 to vector<32x32xi32>
    %39 = arith.select %37, %33, %38 : vector<32x32xi1>, vector<32x32xi32>
    %c0_18 = arith.constant 0 : index
    %c0_19 = arith.constant 0 : index
    %c0_20 = arith.constant 0 : index
    %40 = vector.load %arg7[%c0_18, %c0_19, %c0_20] : memref<1x32x32xi32, #tpu.memory_space<vmem>>, vector<1x32x32xi32>
    %41 = vector.shape_cast %40 : vector<1x32x32xi32> to vector<32x32xi32>
    %42 = vector.shape_cast %39 : vector<32x32xi32> to vector<1x32x32xi32>
    tpu.vector_store %arg7[%c0_18, %c0_19, %c0_20], %42 {strides = array<i32>} : memref<1x32x32xi32, #tpu.memory_space<vmem>>, vector<1x32x32xi32>,
    return
  }
  func.func @transform_0(%arg0: i32, %arg1: i32, %arg2: i32) -> (i32, i32, i32) {
    %c0_i32 = arith.constant 0 : i32
    %c0_i32_0 = arith.constant 0 : i32
    %c0_i32_1 = arith.constant 0 : i32
    return %arg0, %c0_i32, %c0_i32_0 : i32, i32, i32
  }
  func.func @transform_1(%arg0: i32, %arg1: i32, %arg2: i32) -> (i32, i32) {
    %c0_i32 = arith.constant 0 : i32
    %c0_i32_0 = arith.constant 0 : i32
    return %c0_i32, %arg1 : i32, i32
  }
  func.func @transform_2(%arg0: i32, %arg1: i32, %arg2: i32) -> (i32, i32) {
    %c0_i32 = arith.constant 0 : i32
    %c0_i32_0 = arith.constant 0 : i32
    return %arg2, %c0_i32 : i32, i32
  }
  func.func @transform_3(%arg0: i32, %arg1: i32, %arg2: i32) -> (i32, i32, i32) {
    %c0_i32 = arith.constant 0 : i32
    return %arg0, %arg2, %arg1 : i32, i32, i32
  }
  func.func @transform_4(%arg0: i32, %arg1: i32, %arg2: i32) -> (i32, i32, i32) {
    %c0_i32 = arith.constant 0 : i32
    return %arg0, %arg2, %arg1 : i32, i32, i32
  }
}

</mosaic_0001>

<llo_original>
// kernel: tpu_custom_call.1
$region0: #{tpu_custom_call.1}
  #allocation0 [shape = 'u32[]', space=smem, size = 0x4, offset = 0x4, fixed_abs, tag = 'smem constant byte address 0x4 - core index']
  #allocation1 [shape = 'u32[144,128]{1,0:T(1,128)}', space=vmem, size = 0x12000, scoped, tag = 'internal scratch']
  #allocation2 [shape = 'f32[64,32]{1,0:T(8,128)}', space=vmem, size = 0x8000, scoped, tag = 'scratch operand']
  %s0 = inlined_call_operand.vmem [shape: f32[2,64,16], index: 0, kind: input, shape index: {}]
  %s1 = inlined_call_operand.vmem [shape: f32[16,32], index: 1, kind: input, shape index: {}]
  %s2 = inlined_call_operand.vmem [shape: f32[32,16], index: 2, kind: input, shape index: {}]
  %s3 = inlined_call_operand.vmem [shape: u8[2,32,32], index: 3, kind: input, shape index: {}]
  %s4 = inlined_call_operand.hbm [shape: s32[2,32,32], index: 4, kind: output, shape index: {}]
  %s5 = sld [smem:[#allocation0]]
  $region53: #{tpu_custom_call.1} parent=0
    _
  %s7 = ssub.s32 1, %s5
  %s8 = scalar_select 0, %s7, %s5
  $region1: #{tpu_custom_call.1} parent=0
    #allocation3 [shape = 'u8[32768]{0}', space=vmem, size = 0x8000, scoped, tag = 'output window, operand 0']
    #allocation4 [shape = 's32[2]{0}', space=sflag, size = 0x8, scoped, tag = 'scoped memory for tpu_custom_call.1']
    %9 = vsyncpa [#allocation4], 0
    %s10 = scalar_lea.sflag [#allocation4], 1
    %11 = vsyncpa %s10, 0
    loop: start=0, step=1, limit=4
    $region2: #{tpu_custom_call.1} parent=1 // loop_pre_header
      _
    $region3: #{tpu_custom_call.1} parent=1 // loop_header
      %s13 = sphi 0, %s17
      %p14 = scmp.ge.s32.totalorder %s13, 4
      %s20 = sphi 0, %s39
      %s21 = sphi 0, %s35
      %s22 = sphi 0, %s31
      %s23 = sphi 0, %s20
      %s24 = sphi 0, %s21
      %s25 = sphi 0, %s22
      %s26 = sphi 0, %s23
      %s27 = sphi 0, %s24
      %s28 = sphi 0, %s25
      %s42 = sphi 0, %s44
      %s45 = sphi 0, %s42
      %s46 = sphi 0, %s45
      %s62 = sphi 0, %s46
      %s68 = sphi 0, %s70
      %s71 = sphi 0, %s68
      %s72 = sphi 0, %s71
      %s88 = sphi 0, %s72
      %s94 = sphi 0, %s96
      %s97 = sphi 0, %s94
      %s98 = sphi 0, %s97
      %s114 = sphi 0, %s98
      %s124 = sphi 0, %s126
      %s127 = sphi 0, %s124
      %s128 = sphi 0, %s127
      %s144 = sphi 0, %s128
      %s154 = sphi 0, %s156
      %s157 = sphi 0, %s154
      %s158 = sphi 0, %s157
      %s174 = sphi 0, %s158
    $region4: #{tpu_custom_call.1} parent=1 // loop_header_branch
      %16 = sbr.rel (%p14) target = $region8
    $region5: #{tpu_custom_call.1} parent=1 // loop_body
      %s18 = ssub.s32 %s13, 1
      %s19 = ssub.s32 %s13, 2
      %s29 = sadd.s32 1, %s22
      %p30 = scmp.ge.s32.totalorder %s29, 1
      %s31 = scalar_select %p30, 0, %s29
      %s32 = sadd.s32 1, %s21
      %s33 = scalar_select %p30, %s32, %s21
      %p34 = scmp.ge.s32.totalorder %s33, 1
      %s35 = scalar_select %p34, 0, %s33
      %s36 = sadd.s32 1, %s20
      %s37 = scalar_select %p34, %s36, %s20
      %p38 = scmp.ge.s32.totalorder %s37, 2
      %s39 = scalar_select %p38, 0, %s37
      %s40 = ssub.s32 %s20, %s39
      %p41 = scmp.eq.s32.totalorder %s40, 0
      %s43 = sadd.s32 %s42, 1
      %s44 = scalar_select %p41, %s42, %s43
      %p47 = pneg %p41
      %p48 = scmp.eq.s32.totalorder %s13, 1
      %p49 = por %p47, %p48
      %p50 = scmp.ne.s32.totalorder %s42, %s45
      %p51 = scmp.eq.s32.totalorder %s13, 0
      %p52 = por %p50, %p51
      %p53 = scmp.ne.s32.totalorder %s42, %s45
      %p54 = scmp.eq.s32.totalorder %s18, 1
      %p55 = por %p53, %p54
      %p56 = scmp.ne.s32.totalorder %s45, %s46
      %p57 = scmp.eq.s32.totalorder %s18, 0
      %p58 = por %p56, %p57
      %p59 = scmp.ne.s32.totalorder %s45, %s46
      %p60 = scmp.eq.s32.totalorder %s19, 1
      %p61 = por %p59, %p60
      %p63 = scmp.ne.s32.totalorder %s46, %s62
      %p64 = scmp.eq.s32.totalorder %s19, 0
      %p65 = por %p63, %p64
      %s66 = ssub.s32 %s21, %s35
      %p67 = scmp.eq.s32.totalorder %s66, 0
      %s69 = sadd.s32 %s68, 1
      %s70 = scalar_select %p67, %s68, %s69
      %p73 = pneg %p67
      %p74 = scmp.eq.s32.totalorder %s13, 1
      %p75 = por %p73, %p74
      %p76 = scmp.ne.s32.totalorder %s68, %s71
      %p77 = scmp.eq.s32.totalorder %s13, 0
      %p78 = por %p76, %p77
      %p79 = scmp.ne.s32.totalorder %s68, %s71
      %p80 = scmp.eq.s32.totalorder %s18, 1
      %p81 = por %p79, %p80
      %p82 = scmp.ne.s32.totalorder %s71, %s72
      %p83 = scmp.eq.s32.totalorder %s18, 0
      %p84 = por %p82, %p83
      %p85 = scmp.ne.s32.totalorder %s71, %s72
      %p86 = scmp.eq.s32.totalorder %s19, 1
      %p87 = por %p85, %p86
      %p89 = scmp.ne.s32.totalorder %s72, %s88
      %p90 = scmp.eq.s32.totalorder %s19, 0
      %p91 = por %p89, %p90
      %s92 = ssub.s32 %s22, %s31
      %p93 = scmp.eq.s32.totalorder %s92, 0
      %s95 = sadd.s32 %s94, 1
      %s96 = scalar_select %p93, %s94, %s95
      %p99 = pneg %p93
      %p100 = scmp.eq.s32.totalorder %s13, 1
      %p101 = por %p99, %p100
      %p102 = scmp.ne.s32.totalorder %s94, %s97
      %p103 = scmp.eq.s32.totalorder %s13, 0
      %p104 = por %p102, %p103
      %p105 = scmp.ne.s32.totalorder %s94, %s97
      %p106 = scmp.eq.s32.totalorder %s18, 1
      %p107 = por %p105, %p106
      %p108 = scmp.ne.s32.totalorder %s97, %s98
      %p109 = scmp.eq.s32.totalorder %s18, 0
      %p110 = por %p108, %p109
      %p111 = scmp.ne.s32.totalorder %s97, %s98
      %p112 = scmp.eq.s32.totalorder %s19, 1
      %p113 = por %p111, %p112
      %p115 = scmp.ne.s32.totalorder %s98, %s114
      %p116 = scmp.eq.s32.totalorder %s19, 0
      %p117 = por %p115, %p116
      %s118 = ssub.s32 %s20, %s39
      %s119 = ssub.s32 %s22, %s31
      %s120 = sor.u32 %s118, %s119
      %s121 = ssub.s32 %s21, %s35
      %s122 = sor.u32 %s120, %s121
      %p123 = scmp.eq.s32.totalorder %s122, 0
      %s125 = sadd.s32 %s124, 1
      %s126 = scalar_select %p123, %s124, %s125
      %p129 = pneg %p123
      %p130 = scmp.eq.s32.totalorder %s13, 1
      %p131 = por %p129, %p130
      %p132 = scmp.ne.s32.totalorder %s124, %s127
      %p133 = scmp.eq.s32.totalorder %s13, 0
      %p134 = por %p132, %p133
      %p135 = scmp.ne.s32.totalorder %s124, %s127
      %p136 = scmp.eq.s32.totalorder %s18, 1
      %p137 = por %p135, %p136
      %p138 = scmp.ne.s32.totalorder %s127, %s128
      %p139 = scmp.eq.s32.totalorder %s18, 0
      %p140 = por %p138, %p139
      %p141 = scmp.ne.s32.totalorder %s127, %s128
      %p142 = scmp.eq.s32.totalorder %s19, 1
      %p143 = por %p141, %p142
      %p145 = scmp.ne.s32.totalorder %s128, %s144
      %p146 = scmp.eq.s32.totalorder %s19, 0
      %p147 = por %p145, %p146
      %s148 = ssub.s32 %s20, %s39
      %s149 = ssub.s32 %s22, %s31
      %s150 = sor.u32 %s148, %s149
      %s151 = ssub.s32 %s21, %s35
      %s152 = sor.u32 %s150, %s151
      %p153 = scmp.eq.s32.totalorder %s152, 0
      %s155 = sadd.s32 %s154, 1
      %s156 = scalar_select %p153, %s154, %s155
      %p159 = pneg %p153
      %p160 = scmp.eq.s32.totalorder %s13, 1
      %p161 = por %p159, %p160
      %p162 = scmp.ne.s32.totalorder %s154, %s157
      %p163 = scmp.eq.s32.totalorder %s13, 0
      %p164 = por %p162, %p163
      %p165 = scmp.ne.s32.totalorder %s154, %s157
      %p166 = scmp.eq.s32.totalorder %s18, 1
      %p167 = por %p165, %p166
      %p168 = scmp.ne.s32.totalorder %s157, %s158
      %p169 = scmp.eq.s32.totalorder %s18, 0
      %p170 = por %p168, %p169
      %p171 = scmp.ne.s32.totalorder %s157, %s158
      %p172 = scmp.eq.s32.totalorder %s19, 1
      %p173 = por %p171, %p172
      %p175 = scmp.ne.s32.totalorder %s158, %s174
      %p176 = scmp.eq.s32.totalorder %s19, 0
      %p177 = por %p175, %p176
      %p178 = scmp.le.s32.totalorder 1, %s13
      %p179 = scmp.lt.s32.totalorder %s13, 3
      %p180 = pnand %p178, %p179
      %p181 = pneg %p180
      // Predicated region
      $region9: #{tpu_custom_call.1} parent=5 // pred_check
        _
      $region10: #{tpu_custom_call.1} parent=5 // pred_check_branch
        %183 = sbr.rel (%p180) target = $region12
      $region11: #{tpu_custom_call.1} parent=5 // pred_region
        %s184 = ssub.s32 %s13, 1
        // Predicated region
        $region13: #{tpu_custom_call.1} parent=11 // pred_check
          %p185 = pneg %p84
        $region14: #{tpu_custom_call.1} parent=11 // pred_check_branch
          %187 = sbr.rel (%p185) target = $region16
        $region15: #{tpu_custom_call.1} parent=11 // pred_region
          %p188 = scmp.lt.s32.totalorder %s24, 0
          %s189 = scalar_select %p188, %s24, 0
          %s190 = smul.addr %s189, 8
          %s191 = scalar_lea.vmem %s1, %s190
        $region16: #{tpu_custom_call.1} parent=11 // pred_fallthru
          _
        // Predicated region
        $region17: #{tpu_custom_call.1} parent=11 // pred_check
          %p192 = pneg %p110
        $region18: #{tpu_custom_call.1} parent=11 // pred_check_branch
          %194 = sbr.rel (%p192) target = $region20
        $region19: #{tpu_custom_call.1} parent=11 // pred_region
          %s195 = smul.u32 4, %s25
          %p196 = scmp.lt.s32.totalorder %s195, 3
          %s197 = scalar_select %p196, %s195, 3
          %s198 = smul.addr %s197, 8
          %s199 = scalar_lea.vmem %s2, %s198
          %s200 = smul.u32 4, %s25
        $region20: #{tpu_custom_call.1} parent=11 // pred_fallthru
          _
      $region12: #{tpu_custom_call.1} parent=5 // pred_fallthru
        _
      %p201 = scmp.lt.s32.totalorder %s13, 2
      // Predicated region
      $region21: #{tpu_custom_call.1} parent=5 // pred_check
        %p202 = pneg %p201
      $region22: #{tpu_custom_call.1} parent=5 // pred_check_branch
        %204 = sbr.rel (%p202) target = $region24
      $region23: #{tpu_custom_call.1} parent=5 // pred_region
        // Predicated region
        $region25: #{tpu_custom_call.1} parent=23 // pred_check
          %p205 = pneg %p52
        $region26: #{tpu_custom_call.1} parent=23 // pred_check_branch
          %207 = sbr.rel (%p205) target = $region28
        $region27: #{tpu_custom_call.1} parent=23 // pred_region
          %p208 = scmp.lt.s32.totalorder %s20, 1
          %s209 = scalar_select %p208, %s20, 1
          %s210 = smul.addr %s209, 8
          %s211 = smul.addr %s210, 8
          %s212 = scalar_lea.vmem %s0, %s211
        $region28: #{tpu_custom_call.1} parent=23 // pred_fallthru
          _
        // Predicated region
        $region29: #{tpu_custom_call.1} parent=23 // pred_check
          %p213 = pneg %p134
        $region30: #{tpu_custom_call.1} parent=23 // pred_check_branch
          %215 = sbr.rel (%p213) target = $region32
        $region31: #{tpu_custom_call.1} parent=23 // pred_region
          %p216 = scmp.lt.s32.totalorder %s20, 1
          %s217 = scalar_select %p216, %s20, 1
          %p218 = scmp.lt.s32.totalorder %s22, 0
          %s219 = scalar_select %p218, %s22, 0
          %p220 = scmp.lt.s32.totalorder %s21, 0
          %s221 = scalar_select %p220, %s21, 0
          %s222 = sadd.s32 %s221, %s219
          %s223 = sadd.s32 %s222, %s217
          %s224 = smul.addr %s223, 8
          %s225 = scalar_lea.vmem %s3, %s224
        $region32: #{tpu_custom_call.1} parent=23 // pred_fallthru
          _
      $region24: #{tpu_custom_call.1} parent=5 // pred_fallthru
        _
      %p226 = scmp.le.s32.totalorder 1, %s13
      %p227 = scmp.lt.s32.totalorder %s13, 3
      %p228 = pnand %p226, %p227
      %p229 = pneg %p228
      // Predicated region
      $region33: #{tpu_custom_call.1} parent=5 // pred_check
        _
      $region34: #{tpu_custom_call.1} parent=5 // pred_check_branch
        %231 = sbr.rel (%p228) target = $region36
      $region35: #{tpu_custom_call.1} parent=5 // pred_region
        %s232 = ssub.s32 %s13, 1
        %p233 = scmp.lt.s32.totalorder %s23, 1
        %s234 = scalar_select %p233, %s23, 1
        %s235 = smul.addr %s234, 8
        %s236 = smul.addr %s235, 8
        %s237 = scalar_lea.vmem %s0, %s236
        %p238 = pneg %p58
        %p239 = pneg %p55
        %p240 = scmp.lt.s32.totalorder %s24, 0
        %s241 = scalar_select %p240, %s24, 0
        %s242 = smul.addr %s241, 8
        %s243 = scalar_lea.vmem %s1, %s242
        %p244 = pneg %p84
        %p245 = pneg %p81
        %s246 = smul.u32 4, %s25
        %p247 = scmp.lt.s32.totalorder %s246, 3
        %s248 = scalar_select %p247, %s246, 3
        %s249 = smul.addr %s248, 8
        %s250 = scalar_lea.vmem %s2, %s249
        %p251 = pneg %p110
        %p252 = pneg %p107
        %p253 = scmp.lt.s32.totalorder %s23, 1
        %s254 = scalar_select %p253, %s23, 1
        %p255 = scmp.lt.s32.totalorder %s25, 0
        %s256 = scalar_select %p255, %s25, 0
        %p257 = scmp.lt.s32.totalorder %s24, 0
        %s258 = scalar_select %p257, %s24, 0
        %s259 = sadd.s32 %s258, %s256
        %s260 = sadd.s32 %s259, %s254
        %s261 = smul.addr %s260, 8
        %s262 = scalar_lea.vmem %s3, %s261
        %p263 = pneg %p140
        %p264 = pneg %p137
        %p265 = pneg %p170
        %p266 = pneg %p167
        %s267 = sand.u32 %s157, 1
        %s268 = scalar_lea.sflag [#allocation4], %s267
        %s269 = sand.u32 %s157, 1
        %s270 = smul.addr %s269, 32
        %s271 = scalar_lea.vmem [#allocation3], %s270
        %p272 = scmp.lt.s32.totalorder %s23, 1
        %s273 = scalar_select %p272, %s23, 1
        %s274 = smul.addr %s273, 8
        %s275 = smul.addr %s274, 8
        %s276 = scalar_lea.vmem %s0, %s275
        %p277 = scmp.lt.s32.totalorder %s24, 0
        %s278 = scalar_select %p277, %s24, 0
        %s279 = smul.addr %s278, 8
        %s280 = scalar_lea.vmem %s1, %s279
        %s281 = smul.u32 4, %s25
        %p282 = scmp.lt.s32.totalorder %s281, 3
        %s283 = scalar_select %p282, %s281, 3
        %s284 = smul.addr %s283, 8
        %s285 = scalar_lea.vmem %s2, %s284
        %s286 = smul.u32 4, %s25
        %p287 = scmp.lt.s32.totalorder %s23, 1
        %s288 = scalar_select %p287, %s23, 1
        %p289 = scmp.lt.s32.totalorder %s25, 0
        %s290 = scalar_select %p289, %s25, 0
        %p291 = scmp.lt.s32.totalorder %s24, 0
        %s292 = scalar_select %p291, %s24, 0
        %s293 = sadd.s32 %s292, %s290
        %s294 = sadd.s32 %s293, %s288
        %s295 = smul.addr %s294, 8
        %s296 = scalar_lea.vmem %s3, %s295
        %s297 = smul.u32 4, %s25
        %p300 = scmp.eq.s32.totalorder %s25, 0
        // Predicated region
        $region37: #{tpu_custom_call.1} parent=35 // pred_check
          %p301 = pneg %p300
        $region38: #{tpu_custom_call.1} parent=35 // pred_check_branch
          %303 = sbr.rel (%p301) target = $region40
        $region39: #{tpu_custom_call.1} parent=35 // pred_region
          %v304 = vld [vmem:[%s276] sm:$0xff]
          %v305 = vld [vmem:[%s276 + $0x8] sm:$0xff]
          %v306 = vld [vmem:[%s276 + $0x10] sm:$0xff]
          %v307 = vld [vmem:[%s276 + $0x18] sm:$0xff]
          %v308 = vld [vmem:[%s276 + $0x20] sm:$0xff]
          %v309 = vld [vmem:[%s276 + $0x28] sm:$0xff]
          %v310 = vld [vmem:[%s276 + $0x30] sm:$0xff]
          %v311 = vld [vmem:[%s276 + $0x38] sm:$0xff]
          %v312 = vld [vmem:[%s280] sm:$0xff]
          %v313 = vld [vmem:[%s280 + $0x8] sm:$0xff]
          %vm314 = vcmask 130048
          %v316 = vsel %vm314, %v304, 0
          %v319 = vsel %vm314, %v305, 0
          %v322 = vsel %vm314, %v306, 0
          %v325 = vsel %vm314, %v307, 0
          %v328 = vsel %vm314, %v308, 0
          %v331 = vsel %vm314, %v309, 0
          %v334 = vsel %vm314, %v310, 0
          %v337 = vsel %vm314, %v311, 0
          %339 = vmatprep.subr.mxu0 0.0
          %340 = vmatpush1.msra.mxu0 0.0
          %341 = vmatprep.subr.mxu0 0.0
          %342 = vmatpush1.msra.mxu0 0.0
          %343 = vmatprep.subr.mxu0 0.0
          %344 = vmatpush1.msra.mxu0 0.0
          %345 = vmatprep.subr.mxu0 0.0
          %346 = vmatpush1.msra.mxu0 0.0
          %347 = vmatprep.subr.mxu0 0.0
          %348 = vmatpush1.msra.mxu0 0.0
          %349 = vmatprep.subr.mxu0 0.0
          %350 = vmatpush1.msra.mxu0 0.0
          %351 = vmatprep.subr.mxu0 0.0
          %352 = vmatpush1.msra.mxu0 0.0
          %353 = vmatprep.subr.mxu0 0.0
          %354 = vmatpush1.msra.mxu0 0.0
          %355 = vmatprep.subr.mxu0 0.0
          %356 = vmatpush1.msra.mxu0 0.0
          %357 = vmatprep.subr.mxu0 0.0
          %358 = vmatpush1.msra.mxu0 0.0
          %359 = vmatprep.subr.mxu0 0.0
          %360 = vmatpush1.msra.mxu0 0.0
          %361 = vmatprep.subr.mxu0 0.0
          %362 = vmatpush1.msra.mxu0 0.0
          %363 = vmatprep.subr.mxu0 0.0
          %364 = vmatpush1.msra.mxu0 0.0
          %365 = vmatprep.subr.mxu0 0.0
          %366 = vmatpush1.msra.mxu0 0.0
          %367 = vmatprep.subr.mxu0 0.0
          %368 = vmatpush1.msra.mxu0 %v313
          %369 = vmatprep.subr.mxu0 0.0
          %370 = vmatpush1.msra.mxu0 %v312
          %371 = vmatprep.subr.mxu0 0.0
          %372 = vmatpush2.msra.mxu0 0.0
          %373 = vmatprep.subr.mxu0 0.0
          %374 = vmatpush2.msra.mxu0 0.0
          %375 = vmatprep.subr.mxu0 0.0
          %376 = vmatpush2.msra.mxu0 0.0
          %377 = vmatprep.subr.mxu0 0.0
          %378 = vmatpush2.msra.mxu0 0.0
          %379 = vmatprep.subr.mxu0 0.0
          %380 = vmatpush2.msra.mxu0 0.0
          %381 = vmatprep.subr.mxu0 0.0
          %382 = vmatpush2.msra.mxu0 0.0
          %383 = vmatprep.subr.mxu0 0.0
          %384 = vmatpush2.msra.mxu0 0.0
          %385 = vmatprep.subr.mxu0 0.0
          %386 = vmatpush2.msra.mxu0 0.0
          %387 = vmatprep.subr.mxu0 0.0
          %388 = vmatpush2.msra.mxu0 0.0
          %389 = vmatprep.subr.mxu0 0.0
          %390 = vmatpush2.msra.mxu0 0.0
          %391 = vmatprep.subr.mxu0 0.0
          %392 = vmatpush2.msra.mxu0 0.0
          %393 = vmatprep.subr.mxu0 0.0
          %394 = vmatpush2.msra.mxu0 0.0
          %395 = vmatprep.subr.mxu0 0.0
          %396 = vmatpush2.msra.mxu0 0.0
          %397 = vmatprep.subr.mxu0 0.0
          %398 = vmatpush2.msra.mxu0 0.0
          %399 = vmatprep.subr.mxu0 0.0
          %400 = vmatpush2.msra.mxu0 0.0
          %401 = vmatprep.subr.mxu0 0.0
          %402 = vmatpush2.msra.mxu0 0.0
          %403 = vmatprep.mubr.f32.mxu0 0.0
          %404 = vmatmul.mubr.f32.gmra.mxu0 %v316
          %v405 = vpop.f32.mrf.mxu0
          %v406 = vadd.f32 0.0, %v405
          %v407 = vpop.f32.mrf.mxu0
          %408 = vmatprep.mubr.f32.mxu0 0.0
          %409 = vmatmul.mubr.f32.gmra.mxu0 %v319
          %v410 = vpop.f32.mrf.mxu0
          %v411 = vadd.f32 0.0, %v410
          %v412 = vpop.f32.mrf.mxu0
          %413 = vmatprep.mubr.f32.mxu0 0.0
          %414 = vmatmul.mubr.f32.gmra.mxu0 %v322
          %v415 = vpop.f32.mrf.mxu0
          %v416 = vadd.f32 0.0, %v415
          %v417 = vpop.f32.mrf.mxu0
          %418 = vmatprep.mubr.f32.mxu0 0.0
          %419 = vmatmul.mubr.f32.gmra.mxu0 %v325
          %v420 = vpop.f32.mrf.mxu0
          %v421 = vadd.f32 0.0, %v420
          %v422 = vpop.f32.mrf.mxu0
          %423 = vmatprep.mubr.f32.mxu0 0.0
          %424 = vmatmul.mubr.f32.gmra.mxu0 %v328
          %v425 = vpop.f32.mrf.mxu0
          %v426 = vadd.f32 0.0, %v425
          %v427 = vpop.f32.mrf.mxu0
          %428 = vmatprep.mubr.f32.mxu0 0.0
          %429 = vmatmul.mubr.f32.gmra.mxu0 %v331
          %v430 = vpop.f32.mrf.mxu0
          %v431 = vadd.f32 0.0, %v430
          %v432 = vpop.f32.mrf.mxu0
          %433 = vmatprep.mubr.f32.mxu0 0.0
          %434 = vmatmul.mubr.f32.gmra.mxu0 %v334
          %v435 = vpop.f32.mrf.mxu0
          %v436 = vadd.f32 0.0, %v435
          %v437 = vpop.f32.mrf.mxu0
          %438 = vmatprep.mubr.f32.mxu0 0.0
          %439 = vmatmul.mubr.f32.gmra.mxu0 %v337
          %v440 = vpop.f32.mrf.mxu0
          %v441 = vadd.f32 0.0, %v440
          %v442 = vpop.f32.mrf.mxu0
          %443 = vdwg.mxu0
          %vm444 = vcmask 261120
          %445 = vst.msk [vmem:[#allocation2] sm:$0xff] %vm444, %v406
          %446 = vst.msk [vmem:[#allocation2 + $0x8] sm:$0xff] %vm444, %v411
          %447 = vst.msk [vmem:[#allocation2 + $0x10] sm:$0xff] %vm444, %v416
          %448 = vst.msk [vmem:[#allocation2 + $0x18] sm:$0xff] %vm444, %v421
          %449 = vst.msk [vmem:[#allocation2 + $0x20] sm:$0xff] %vm444, %v426
          %450 = vst.msk [vmem:[#allocation2 + $0x28] sm:$0xff] %vm444, %v431
          %451 = vst.msk [vmem:[#allocation2 + $0x30] sm:$0xff] %vm444, %v436
          %452 = vst.msk [vmem:[#allocation2 + $0x38] sm:$0xff] %vm444, %v441
        $region40: #{tpu_custom_call.1} parent=35 // pred_fallthru
          _
        %v453 = vld [vmem:[%s285] sm:$0xff]
        %v454 = vld [vmem:[%s285 + $0x8] sm:$0xff]
        %v455 = vld [vmem:[%s285 + $0x10] sm:$0xff]
        %v456 = vld [vmem:[%s285 + $0x18] sm:$0xff]
        %v457 = vld [vmem:[#allocation2] sm:$0xff]
        %v458 = vld [vmem:[#allocation2 + $0x8] sm:$0xff]
        %vm459 = vcmask 130048
        %v461 = vsel %vm459, %v453, 0
        %v464 = vsel %vm459, %v454, 0
        %v467 = vsel %vm459, %v455, 0
        %v470 = vsel %vm459, %v456, 0
        %472 = vmatprep.subr.mxu0 0.0
        %473 = vmatpush1.msra.mxu0 0.0
        %474 = vmatprep.subr.mxu0 0.0
        %475 = vmatpush1.msra.mxu0 0.0
        %476 = vmatprep.subr.mxu0 0.0
        %477 = vmatpush1.msra.mxu0 0.0
        %478 = vmatprep.subr.mxu0 0.0
        %479 = vmatpush1.msra.mxu0 0.0
        %480 = vmatprep.subr.mxu0 0.0
        %481 = vmatpush1.msra.mxu0 0.0
        %482 = vmatprep.subr.mxu0 0.0
        %483 = vmatpush1.msra.mxu0 0.0
        %484 = vmatprep.subr.mxu0 0.0
        %485 = vmatpush1.msra.mxu0 0.0
        %486 = vmatprep.subr.mxu0 0.0
        %487 = vmatpush1.msra.mxu0 0.0
        %488 = vmatprep.subr.mxu0 0.0
        %489 = vmatpush1.msra.mxu0 0.0
        %490 = vmatprep.subr.mxu0 0.0
        %491 = vmatpush1.msra.mxu0 0.0
        %492 = vmatprep.subr.mxu0 0.0
        %493 = vmatpush1.msra.mxu0 0.0
        %494 = vmatprep.subr.mxu0 0.0
        %495 = vmatpush1.msra.mxu0 0.0
        %496 = vmatprep.subr.mxu0 0.0
        %497 = vmatpush1.msra.mxu0 0.0
        %498 = vmatprep.subr.mxu0 0.0
        %499 = vmatpush1.msra.mxu0 0.0
        %500 = vmatprep.subr.mxu0 0.0
        %501 = vmatpush1.msra.mxu0 %v458
        %502 = vmatprep.subr.mxu0 0.0
        %503 = vmatpush1.msra.mxu0 %v457
        %504 = vmatprep.subr.mxu0 0.0
        %505 = vmatpush2.msra.mxu0 0.0
        %506 = vmatprep.subr.mxu0 0.0
        %507 = vmatpush2.msra.mxu0 0.0
        %508 = vmatprep.subr.mxu0 0.0
        %509 = vmatpush2.msra.mxu0 0.0
        %510 = vmatprep.subr.mxu0 0.0
        %511 = vmatpush2.msra.mxu0 0.0
        %512 = vmatprep.subr.mxu0 0.0
        %513 = vmatpush2.msra.mxu0 0.0
        %514 = vmatprep.subr.mxu0 0.0
        %515 = vmatpush2.msra.mxu0 0.0
        %516 = vmatprep.subr.mxu0 0.0
        %517 = vmatpush2.msra.mxu0 0.0
        %518 = vmatprep.subr.mxu0 0.0
        %519 = vmatpush2.msra.mxu0 0.0
        %520 = vmatprep.subr.mxu0 0.0
        %521 = vmatpush2.msra.mxu0 0.0
        %522 = vmatprep.subr.mxu0 0.0
        %523 = vmatpush2.msra.mxu0 0.0
        %524 = vmatprep.subr.mxu0 0.0
        %525 = vmatpush2.msra.mxu0 0.0
        %526 = vmatprep.subr.mxu0 0.0
        %527 = vmatpush2.msra.mxu0 0.0
        %528 = vmatprep.subr.mxu0 0.0
        %529 = vmatpush2.msra.mxu0 0.0
        %530 = vmatprep.subr.mxu0 0.0
        %531 = vmatpush2.msra.mxu0 0.0
        %532 = vmatprep.subr.mxu0 0.0
        %533 = vmatpush2.msra.mxu0 0.0
        %534 = vmatprep.subr.mxu0 0.0
        %535 = vmatpush2.msra.mxu0 0.0
        %536 = vmatprep.mubr.f32.mxu0 0.0
        %537 = vmatmul.mubr.f32.gmra.mxu0 %v461
        %v538 = vpop.f32.mrf.mxu0
        %v539 = vadd.f32 0.0, %v538
        %v540 = vpop.f32.mrf.mxu0
        %541 = vmatprep.mubr.f32.mxu0 0.0
        %542 = vmatmul.mubr.f32.gmra.mxu0 %v464
        %v543 = vpop.f32.mrf.mxu0
        %v544 = vadd.f32 0.0, %v543
        %v545 = vpop.f32.mrf.mxu0
        %546 = vmatprep.mubr.f32.mxu0 0.0
        %547 = vmatmul.mubr.f32.gmra.mxu0 %v467
        %v548 = vpop.f32.mrf.mxu0
        %v549 = vadd.f32 0.0, %v548
        %v550 = vpop.f32.mrf.mxu0
        %551 = vmatprep.mubr.f32.mxu0 0.0
        %552 = vmatmul.mubr.f32.gmra.mxu0 %v470
        %v553 = vpop.f32.mrf.mxu0
        %v554 = vadd.f32 0.0, %v553
        %v555 = vpop.f32.mrf.mxu0
        %556 = vdwg.mxu0
        %s557 = scalar_lea.vmem [#allocation2], 16
        %v558 = vld [vmem:[%s557] sm:$0xff]
        %v559 = vld [vmem:[%s557 + $0x8] sm:$0xff]
        %560 = vmatprep.subr.mxu0 0.0
        %561 = vmatpush1.msra.mxu0 0.0
        %562 = vmatprep.subr.mxu0 0.0
        %563 = vmatpush1.msra.mxu0 0.0
        %564 = vmatprep.subr.mxu0 0.0
        %565 = vmatpush1.msra.mxu0 0.0
        %566 = vmatprep.subr.mxu0 0.0
        %567 = vmatpush1.msra.mxu0 0.0
        %568 = vmatprep.subr.mxu0 0.0
        %569 = vmatpush1.msra.mxu0 0.0
        %570 = vmatprep.subr.mxu0 0.0
        %571 = vmatpush1.msra.mxu0 0.0
        %572 = vmatprep.subr.mxu0 0.0
        %573 = vmatpush1.msra.mxu0 0.0
        %574 = vmatprep.subr.mxu0 0.0
        %575 = vmatpush1.msra.mxu0 0.0
        %576 = vmatprep.subr.mxu0 0.0
        %577 = vmatpush1.msra.mxu0 0.0
        %578 = vmatprep.subr.mxu0 0.0
        %579 = vmatpush1.msra.mxu0 0.0
        %580 = vmatprep.subr.mxu0 0.0
        %581 = vmatpush1.msra.mxu0 0.0
        %582 = vmatprep.subr.mxu0 0.0
        %583 = vmatpush1.msra.mxu0 0.0
        %584 = vmatprep.subr.mxu0 0.0
        %585 = vmatpush1.msra.mxu0 0.0
        %586 = vmatprep.subr.mxu0 0.0
        %587 = vmatpush1.msra.mxu0 0.0
        %588 = vmatprep.subr.mxu0 0.0
        %589 = vmatpush1.msra.mxu0 %v559
        %590 = vmatprep.subr.mxu0 0.0
        %591 = vmatpush1.msra.mxu0 %v558
        %592 = vmatprep.subr.mxu0 0.0
        %593 = vmatpush2.msra.mxu0 0.0
        %594 = vmatprep.subr.mxu0 0.0
        %595 = vmatpush2.msra.mxu0 0.0
        %596 = vmatprep.subr.mxu0 0.0
        %597 = vmatpush2.msra.mxu0 0.0
        %598 = vmatprep.subr.mxu0 0.0
        %599 = vmatpush2.msra.mxu0 0.0
        %600 = vmatprep.subr.mxu0 0.0
        %601 = vmatpush2.msra.mxu0 0.0
        %602 = vmatprep.subr.mxu0 0.0
        %603 = vmatpush2.msra.mxu0 0.0
        %604 = vmatprep.subr.mxu0 0.0
        %605 = vmatpush2.msra.mxu0 0.0
        %606 = vmatprep.subr.mxu0 0.0
        %607 = vmatpush2.msra.mxu0 0.0
        %608 = vmatprep.subr.mxu0 0.0
        %609 = vmatpush2.msra.mxu0 0.0
        %610 = vmatprep.subr.mxu0 0.0
        %611 = vmatpush2.msra.mxu0 0.0
        %612 = vmatprep.subr.mxu0 0.0
        %613 = vmatpush2.msra.mxu0 0.0
        %614 = vmatprep.subr.mxu0 0.0
        %615 = vmatpush2.msra.mxu0 0.0
        %616 = vmatprep.subr.mxu0 0.0
        %617 = vmatpush2.msra.mxu0 0.0
        %618 = vmatprep.subr.mxu0 0.0
        %619 = vmatpush2.msra.mxu0 0.0
        %620 = vmatprep.subr.mxu0 0.0
        %621 = vmatpush2.msra.mxu0 0.0
        %622 = vmatprep.subr.mxu0 0.0
        %623 = vmatpush2.msra.mxu0 0.0
        %624 = vmatprep.mubr.f32.mxu0 0.0
        %625 = vmatmul.mubr.f32.gmra.mxu0 %v461
        %v626 = vpop.f32.mrf.mxu0
        %v627 = vadd.f32 0.0, %v626
        %v628 = vpop.f32.mrf.mxu0
        %629 = vmatprep.mubr.f32.mxu0 0.0
        %630 = vmatmul.mubr.f32.gmra.mxu0 %v464
        %v631 = vpop.f32.mrf.mxu0
        %v632 = vadd.f32 0.0, %v631
        %v633 = vpop.f32.mrf.mxu0
        %634 = vmatprep.mubr.f32.mxu0 0.0
        %635 = vmatmul.mubr.f32.gmra.mxu0 %v467
        %v636 = vpop.f32.mrf.mxu0
        %v637 = vadd.f32 0.0, %v636
        %v638 = vpop.f32.mrf.mxu0
        %639 = vmatprep.mubr.f32.mxu0 0.0
        %640 = vmatmul.mubr.f32.gmra.mxu0 %v470
        %v641 = vpop.f32.mrf.mxu0
        %v642 = vadd.f32 0.0, %v641
        %v643 = vpop.f32.mrf.mxu0
        %644 = vdwg.mxu0
        %vm645 = vcmp.gt.f32.partialorder %v627, %v539
        %vm646 = vcmp.gt.f32.partialorder %v632, %v544
        %vm647 = vcmp.gt.f32.partialorder %v637, %v549
        %vm648 = vcmp.gt.f32.partialorder %v642, %v554
        %v649 = vsel %vm645, %v627, %v539
        %v650 = vsel %vm646, %v632, %v544
        %v651 = vsel %vm647, %v637, %v549
        %v652 = vsel %vm648, %v642, %v554
        %v653 = vsel %vm645, 1, 0
        %v654 = vsel %vm646, 1, 0
        %v655 = vsel %vm647, 1, 0
        %v656 = vsel %vm648, 1, 0
        %s657 = scalar_lea.vmem [#allocation2], 32
        %v658 = vld [vmem:[%s657] sm:$0xff]
        %v659 = vld [vmem:[%s657 + $0x8] sm:$0xff]
        %660 = vmatprep.subr.mxu0 0.0
        %661 = vmatpush1.msra.mxu0 0.0
        %662 = vmatprep.subr.mxu0 0.0
        %663 = vmatpush1.msra.mxu0 0.0
        %664 = vmatprep.subr.mxu0 0.0
        %665 = vmatpush1.msra.mxu0 0.0
        %666 = vmatprep.subr.mxu0 0.0
        %667 = vmatpush1.msra.mxu0 0.0
        %668 = vmatprep.subr.mxu0 0.0
        %669 = vmatpush1.msra.mxu0 0.0
        %670 = vmatprep.subr.mxu0 0.0
        %671 = vmatpush1.msra.mxu0 0.0
        %672 = vmatprep.subr.mxu0 0.0
        %673 = vmatpush1.msra.mxu0 0.0
        %674 = vmatprep.subr.mxu0 0.0
        %675 = vmatpush1.msra.mxu0 0.0
        %676 = vmatprep.subr.mxu0 0.0
        %677 = vmatpush1.msra.mxu0 0.0
        %678 = vmatprep.subr.mxu0 0.0
        %679 = vmatpush1.msra.mxu0 0.0
        %680 = vmatprep.subr.mxu0 0.0
        %681 = vmatpush1.msra.mxu0 0.0
        %682 = vmatprep.subr.mxu0 0.0
        %683 = vmatpush1.msra.mxu0 0.0
        %684 = vmatprep.subr.mxu0 0.0
        %685 = vmatpush1.msra.mxu0 0.0
        %686 = vmatprep.subr.mxu0 0.0
        %687 = vmatpush1.msra.mxu0 0.0
        %688 = vmatprep.subr.mxu0 0.0
        %689 = vmatpush1.msra.mxu0 %v659
        %690 = vmatprep.subr.mxu0 0.0
        %691 = vmatpush1.msra.mxu0 %v658
        %692 = vmatprep.subr.mxu0 0.0
        %693 = vmatpush2.msra.mxu0 0.0
        %694 = vmatprep.subr.mxu0 0.0
        %695 = vmatpush2.msra.mxu0 0.0
        %696 = vmatprep.subr.mxu0 0.0
        %697 = vmatpush2.msra.mxu0 0.0
        %698 = vmatprep.subr.mxu0 0.0
        %699 = vmatpush2.msra.mxu0 0.0
        %700 = vmatprep.subr.mxu0 0.0
        %701 = vmatpush2.msra.mxu0 0.0
        %702 = vmatprep.subr.mxu0 0.0
        %703 = vmatpush2.msra.mxu0 0.0
        %704 = vmatprep.subr.mxu0 0.0
        %705 = vmatpush2.msra.mxu0 0.0
        %706 = vmatprep.subr.mxu0 0.0
        %707 = vmatpush2.msra.mxu0 0.0
        %708 = vmatprep.subr.mxu0 0.0
        %709 = vmatpush2.msra.mxu0 0.0
        %710 = vmatprep.subr.mxu0 0.0
        %711 = vmatpush2.msra.mxu0 0.0
        %712 = vmatprep.subr.mxu0 0.0
        %713 = vmatpush2.msra.mxu0 0.0
        %714 = vmatprep.subr.mxu0 0.0
        %715 = vmatpush2.msra.mxu0 0.0
        %716 = vmatprep.subr.mxu0 0.0
        %717 = vmatpush2.msra.mxu0 0.0
        %718 = vmatprep.subr.mxu0 0.0
        %719 = vmatpush2.msra.mxu0 0.0
        %720 = vmatprep.subr.mxu0 0.0
        %721 = vmatpush2.msra.mxu0 0.0
        %722 = vmatprep.subr.mxu0 0.0
        %723 = vmatpush2.msra.mxu0 0.0
        %724 = vmatprep.mubr.f32.mxu0 0.0
        %725 = vmatmul.mubr.f32.gmra.mxu0 %v461
        %v726 = vpop.f32.mrf.mxu0
        %v727 = vadd.f32 0.0, %v726
        %v728 = vpop.f32.mrf.mxu0
        %729 = vmatprep.mubr.f32.mxu0 0.0
        %730 = vmatmul.mubr.f32.gmra.mxu0 %v464
        %v731 = vpop.f32.mrf.mxu0
        %v732 = vadd.f32 0.0, %v731
        %v733 = vpop.f32.mrf.mxu0
        %734 = vmatprep.mubr.f32.mxu0 0.0
        %735 = vmatmul.mubr.f32.gmra.mxu0 %v467
        %v736 = vpop.f32.mrf.mxu0
        %v737 = vadd.f32 0.0, %v736
        %v738 = vpop.f32.mrf.mxu0
        %739 = vmatprep.mubr.f32.mxu0 0.0
        %740 = vmatmul.mubr.f32.gmra.mxu0 %v470
        %v741 = vpop.f32.mrf.mxu0
        %v742 = vadd.f32 0.0, %v741
        %v743 = vpop.f32.mrf.mxu0
        %744 = vdwg.mxu0
        %vm745 = vcmp.gt.f32.partialorder %v727, %v649
        %vm746 = vcmp.gt.f32.partialorder %v732, %v650
        %vm747 = vcmp.gt.f32.partialorder %v737, %v651
        %vm748 = vcmp.gt.f32.partialorder %v742, %v652
        %v749 = vsel %vm745, %v727, %v649
        %v750 = vsel %vm746, %v732, %v650
        %v751 = vsel %vm747, %v737, %v651
        %v752 = vsel %vm748, %v742, %v652
        %v753 = vsel %vm745, 2, %v653
        %v754 = vsel %vm746, 2, %v654
        %v755 = vsel %vm747, 2, %v655
        %v756 = vsel %vm748, 2, %v656
        %s757 = scalar_lea.vmem [#allocation2], 48
        %v758 = vld [vmem:[%s757] sm:$0xff]
        %v759 = vld [vmem:[%s757 + $0x8] sm:$0xff]
        %760 = vmatprep.subr.mxu0 0.0
        %761 = vmatpush1.msra.mxu0 0.0
        %762 = vmatprep.subr.mxu0 0.0
        %763 = vmatpush1.msra.mxu0 0.0
        %764 = vmatprep.subr.mxu0 0.0
        %765 = vmatpush1.msra.mxu0 0.0
        %766 = vmatprep.subr.mxu0 0.0
        %767 = vmatpush1.msra.mxu0 0.0
        %768 = vmatprep.subr.mxu0 0.0
        %769 = vmatpush1.msra.mxu0 0.0
        %770 = vmatprep.subr.mxu0 0.0
        %771 = vmatpush1.msra.mxu0 0.0
        %772 = vmatprep.subr.mxu0 0.0
        %773 = vmatpush1.msra.mxu0 0.0
        %774 = vmatprep.subr.mxu0 0.0
        %775 = vmatpush1.msra.mxu0 0.0
        %776 = vmatprep.subr.mxu0 0.0
        %777 = vmatpush1.msra.mxu0 0.0
        %778 = vmatprep.subr.mxu0 0.0
        %779 = vmatpush1.msra.mxu0 0.0
        %780 = vmatprep.subr.mxu0 0.0
        %781 = vmatpush1.msra.mxu0 0.0
        %782 = vmatprep.subr.mxu0 0.0
        %783 = vmatpush1.msra.mxu0 0.0
        %784 = vmatprep.subr.mxu0 0.0
        %785 = vmatpush1.msra.mxu0 0.0
        %786 = vmatprep.subr.mxu0 0.0
        %787 = vmatpush1.msra.mxu0 0.0
        %788 = vmatprep.subr.mxu0 0.0
        %789 = vmatpush1.msra.mxu0 %v759
        %790 = vmatprep.subr.mxu0 0.0
        %791 = vmatpush1.msra.mxu0 %v758
        %792 = vmatprep.subr.mxu0 0.0
        %793 = vmatpush2.msra.mxu0 0.0
        %794 = vmatprep.subr.mxu0 0.0
        %795 = vmatpush2.msra.mxu0 0.0
        %796 = vmatprep.subr.mxu0 0.0
        %797 = vmatpush2.msra.mxu0 0.0
        %798 = vmatprep.subr.mxu0 0.0
        %799 = vmatpush2.msra.mxu0 0.0
        %800 = vmatprep.subr.mxu0 0.0
        %801 = vmatpush2.msra.mxu0 0.0
        %802 = vmatprep.subr.mxu0 0.0
        %803 = vmatpush2.msra.mxu0 0.0
        %804 = vmatprep.subr.mxu0 0.0
        %805 = vmatpush2.msra.mxu0 0.0
        %806 = vmatprep.subr.mxu0 0.0
        %807 = vmatpush2.msra.mxu0 0.0
        %808 = vmatprep.subr.mxu0 0.0
        %809 = vmatpush2.msra.mxu0 0.0
        %810 = vmatprep.subr.mxu0 0.0
        %811 = vmatpush2.msra.mxu0 0.0
        %812 = vmatprep.subr.mxu0 0.0
        %813 = vmatpush2.msra.mxu0 0.0
        %814 = vmatprep.subr.mxu0 0.0
        %815 = vmatpush2.msra.mxu0 0.0
        %816 = vmatprep.subr.mxu0 0.0
        %817 = vmatpush2.msra.mxu0 0.0
        %818 = vmatprep.subr.mxu0 0.0
        %819 = vmatpush2.msra.mxu0 0.0
        %820 = vmatprep.subr.mxu0 0.0
        %821 = vmatpush2.msra.mxu0 0.0
        %822 = vmatprep.subr.mxu0 0.0
        %823 = vmatpush2.msra.mxu0 0.0
        %824 = vmatprep.mubr.f32.mxu0 0.0
        %825 = vmatmul.mubr.f32.gmra.mxu0 %v461
        %v826 = vpop.f32.mrf.mxu0
        %v827 = vadd.f32 0.0, %v826
        %v828 = vpop.f32.mrf.mxu0
        %829 = vmatprep.mubr.f32.mxu0 0.0
        %830 = vmatmul.mubr.f32.gmra.mxu0 %v464
        %v831 = vpop.f32.mrf.mxu0
        %v832 = vadd.f32 0.0, %v831
        %v833 = vpop.f32.mrf.mxu0
        %834 = vmatprep.mubr.f32.mxu0 0.0
        %835 = vmatmul.mubr.f32.gmra.mxu0 %v467
        %v836 = vpop.f32.mrf.mxu0
        %v837 = vadd.f32 0.0, %v836
        %v838 = vpop.f32.mrf.mxu0
        %839 = vmatprep.mubr.f32.mxu0 0.0
        %840 = vmatmul.mubr.f32.gmra.mxu0 %v470
        %v841 = vpop.f32.mrf.mxu0
        %v842 = vadd.f32 0.0, %v841
        %v843 = vpop.f32.mrf.mxu0
        %844 = vdwg.mxu0
        %vm845 = vcmp.gt.f32.partialorder %v827, %v749
        %vm846 = vcmp.gt.f32.partialorder %v832, %v750
        %vm847 = vcmp.gt.f32.partialorder %v837, %v751
        %vm848 = vcmp.gt.f32.partialorder %v842, %v752
        %v849 = vsel %vm845, 3, %v753
        %v850 = vsel %vm846, 3, %v754
        %v851 = vsel %vm847, 3, %v755
        %v852 = vsel %vm848, 3, %v756
        %v853 = vld [vmem:[%s296] sm:$0xff]
        %vm854 = vnez %v853
        %v855 = vsel %vm854, 16843009, 0
        %v856 = vunpack.c.0.s8 %v855
        %v857 = vunpack.c.1.s8 %v855
        %v858 = vunpack.c.2.s8 %v855
        %v859 = vunpack.c.3.s8 %v855
        %v860 = vpack.c.b16 %v856, %v856
        %v861 = vpack.c.b8 %v860, %v860
        %v862 = vpack.c.b16 %v857, %v857
        %v863 = vpack.c.b8 %v862, %v862
        %v864 = vpack.c.b16 %v858, %v858
        %v865 = vpack.c.b8 %v864, %v864
        %v866 = vpack.c.b16 %v859, %v859
        %v867 = vpack.c.b8 %v866, %v866
        %vm868 = vnez %v861
        %vm869 = vnez %v863
        %vm870 = vnez %v865
        %vm871 = vnez %v867
        %v872 = vsel %vm868, 16843009, 0
        %v873 = vsel %vm869, 16843009, 0
        %v874 = vsel %vm870, 16843009, 0
        %v875 = vsel %vm871, 16843009, 0
        %v876 = vunpack.c.0.s8 %v872
        %v877 = vunpack.c.0.s8 %v873
        %v878 = vunpack.c.0.s8 %v874
        %v879 = vunpack.c.0.s8 %v875
        %vm880 = vcmp.ne.s32.totalorder %v876, 0
        %vm881 = vcmp.ne.s32.totalorder %v877, 0
        %vm882 = vcmp.ne.s32.totalorder %v878, 0
        %vm883 = vcmp.ne.s32.totalorder %v879, 0
        %v884 = vsel %vm880, %v849, 0
        %v885 = vsel %vm881, %v850, 0
        %v886 = vsel %vm882, %v851, 0
        %v887 = vsel %vm883, %v852, 0
        %vm888 = vcmask 261120
        %889 = vst.msk [vmem:[%s271] sm:$0xff] %vm888, %v884
        %890 = vst.msk [vmem:[%s271 + $0x8] sm:$0xff] %vm888, %v885
        %891 = vst.msk [vmem:[%s271 + $0x10] sm:$0xff] %vm888, %v886
        %892 = vst.msk [vmem:[%s271 + $0x18] sm:$0xff] %vm888, %v887
        %s893 = sand.u32 %s157, 1
        %s894 = scalar_lea.sflag [#allocation4], %s893
        %s895 = sand.u32 %s157, 1
        %s896 = smul.addr %s895, 32
        %s897 = scalar_lea.vmem [#allocation3], %s896
        // Predicated region
        $region41: #{tpu_custom_call.1} parent=35 // pred_check
          %p898 = pneg %p167
        $region42: #{tpu_custom_call.1} parent=35 // pred_check_branch
          %900 = sbr.rel (%p898) target = $region44
        $region43: #{tpu_custom_call.1} parent=35 // pred_region
          %s901 = smul.u32 4, %s25
          %s903 = ssub.s32 512, 512
          %904 = vsyncadd %s894, %s903
          %s905 = sadd.s32 %s24, %s901
          %s906 = smul.addr %s23, 4
          %s907 = sadd.s32 %s905, %s906
          %s908 = smul.addr %s907, 128
          %s909 = scalar_lea.hbm %s4, %s908
          %s910 = sshll.u32 %s897, 4
          %s911 = int_to_ptr.vmem [resolvable:$true] %s910
          %916 = dma.vmem_to_hbm [thread:$0]  %s911, 512, %s909, %s894, 128, 128, 8
        $region44: #{tpu_custom_call.1} parent=35 // pred_fallthru
          _
      $region36: #{tpu_custom_call.1} parent=5 // pred_fallthru
        _
      %p917 = scmp.le.s32.totalorder 2, %s13
      // Predicated region
      $region45: #{tpu_custom_call.1} parent=5 // pred_check
        %p918 = pneg %p917
      $region46: #{tpu_custom_call.1} parent=5 // pred_check_branch
        %920 = sbr.rel (%p918) target = $region48
      $region47: #{tpu_custom_call.1} parent=5 // pred_region
        %s921 = ssub.s32 %s13, 2
        // Predicated region
        $region49: #{tpu_custom_call.1} parent=47 // pred_check
          %p922 = pneg %p173
        $region50: #{tpu_custom_call.1} parent=47 // pred_check_branch
          %924 = sbr.rel (%p922) target = $region52
        $region51: #{tpu_custom_call.1} parent=47 // pred_region
          %s925 = sand.u32 %s158, 1
          %s926 = scalar_lea.sflag [#allocation4], %s925
          %s927 = sand.u32 %s158, 1
          %s928 = smul.addr %s927, 32
          %s929 = scalar_lea.vmem [#allocation3], %s928
          %930 = dma.done %s926, 512
        $region52: #{tpu_custom_call.1} parent=47 // pred_fallthru
          _
      $region48: #{tpu_custom_call.1} parent=5 // pred_fallthru
        _
    $region6: #{tpu_custom_call.1} parent=1 // loop_footer
      %s17 = sadd.s32 1, %s13
    $region7: #{tpu_custom_call.1} parent=1 // loop_footer_branch
      %12 = sbr.rel target = $region3
    $region8: #{tpu_custom_call.1} parent=1 // loop_exit
      _
    %931 = vsyncpa [#allocation4], 1
    %s932 = scalar_lea.sflag [#allocation4], 1
    %933 = vsyncpa %s932, 1

</llo_original>
